<compile_context>
chip_gen: v7x
topology: tpu7x:2x2x1
jax: 0.10.0
libtpu: 0.0.40
codegen_flags: <defaults>
</compile_context>

<pallas_src>
import jax
import jax.numpy as jnp
from jax import lax
from jax.experimental import pallas as pl
from jax.experimental.pallas import tpu as pltpu


# ----------------------------- forward kernel -----------------------------
def _linear_fwd_kernel(w_ref, b_ref, h_ref, o_ref):
    # w_ref: (1, D) VMEM (same block every step -> stays resident)
    # b_ref: (1, 1) SMEM scalar
    # h_ref: (TILE_N, D) VMEM (pipelined over the batch grid axis)
    # o_ref: (1, TILE_N) VMEM, lane-dense output row
    h = h_ref[...]
    w = w_ref[...]
    # w (1,D) . h (TILE_N,D) contracted on the feature axis -> (1, TILE_N).
    # Avoids materializing w.T / h.T and yields lane-dense stores directly.
    acc = lax.dot_general(
        w, h,
        dimension_numbers=(((1,), (1,)), ((), ())),
        preferred_element_type=jnp.float32,
    )
    o_ref[...] = (acc + b_ref[0, 0]).astype(o_ref.dtype)


def _pick_tile_n(n, d, itemsize=4):
    """Batch-tile size: big enough to hit the HBM roofline, small enough for VMEM."""
    n8 = -(-n // 8) * 8
    if n8 <= 512:
        return int(n8)              # single block == full (sublane-padded) batch
    # Multiple tiles: keep the tile a multiple of 128 so the (1, TILE_N) output
    # blocks stay lane-dense. Budget ~8 MiB for the double-buffered h tile,
    # comfortably under the scoped VMEM default on v5e/v6e/v7x.
    budget = 8 * 1024 * 1024
    cap = max(128, (budget // (2 * d * itemsize)) // 128 * 128)
    return int(min(1024, cap))


def linear_forward(h, weight, bias, *, tile_n=None):
    """h: (N, D) f32, weight: (1, D) f32, bias: (1,) f32 -> (N, 1) f32."""
    n, d = h.shape
    if tile_n is None:
        tile_n = _pick_tile_n(n, d)
    num_tiles = pl.cdiv(n, tile_n)
    n_pad = num_tiles * tile_n           # output slab width (allocation only)
    b2 = bias.reshape(1, 1).astype(jnp.float32)

    bytes_accessed = n * d * h.dtype.itemsize + d * 4 + n_pad * h.dtype.itemsize
    cost = pl.CostEstimate(flops=2 * n * d, transcendentals=0,
                           bytes_accessed=bytes_accessed)

    out_row = pl.pallas_call(
        _linear_fwd_kernel,
        out_shape=jax.ShapeDtypeStruct((1, n_pad), h.dtype),
        grid=(num_tiles,),
        in_specs=[
            pl.BlockSpec((1, d), lambda i: (0, 0)),        # W: resident in VMEM
            pl.BlockSpec(memory_space=pltpu.SMEM),         # bias: SMEM scalar
            pl.BlockSpec((tile_n, d), lambda i: (i, 0)),   # h: pipelined batch tiles
        ],
        out_specs=pl.BlockSpec((1, tile_n), lambda i: (0, i)),  # lane-dense row
        compiler_params=pltpu.CompilerParams(
            dimension_semantics=("parallel",),             # shards across TCs on v7x
        ),
        cost_estimate=cost,
    )(weight, b2, h)

    # Back to the module's (N, 1) layout (cheap wrapper-side slice/reshape).
    return out_row[0, :n].reshape(n, 1)


# -------------------------- regularized loss --------------------------------
def regularized_loss(weight, laplacian, alpha):
    """alpha * W[:, :G] @ L @ W[:, :G].T as a scalar.

    G is tiny (pads to a single (8,128) tile); a dedicated pallas_call would
    cost more in launch + per-step overhead than the ~2*G^2 FLOPs of the
    quadform, so it is computed inline in plain JAX.
    """
    g = laplacian.shape[0]
    p = weight[:, :g]
    return alpha * jnp.squeeze(p @ laplacian @ p.T)


# --------------------------------- wrapper ----------------------------------
class GraphRegularizedLinearModelPallas:
    def __init__(self, graph_prior, input_dim, alpha=0.1, key=None):
        self.alpha = alpha
        self.graph_prior = jnp.asarray(graph_prior, dtype=jnp.float32)
        # Laplacian: diag(row sums) - A
        self.laplacian = jnp.diag(jnp.sum(self.graph_prior, axis=1)) - self.graph_prior
        # Deterministic init mimicking nn.Linear(input_dim, 1): U(-k, k), k=1/sqrt(D)
        key = jax.random.PRNGKey(0) if key is None else key
        kw, kb = jax.random.split(key)
        bound = 1.0 / jnp.sqrt(jnp.float32(input_dim))
        self.weight = jax.random.uniform(kw, (1, input_dim), jnp.float32, -bound, bound)
        self.bias = jax.random.uniform(kb, (1,), jnp.float32, -bound, bound)

    def forward(self, h):
        return linear_forward(h, self.weight, self.bias)

    def regularized_loss(self):
        return regularized_loss(self.weight, self.laplacian, self.alpha)


if __name__ == "__main__":
    key = jax.random.PRNGKey(0)
    k_graph, k_h, k_params, k_h2, k_w2 = jax.random.split(key, 5)

    batch, input_dim, graph_dim = 8, 32, 16

    # Symmetric non-negative graph prior (adjacency-like), deterministic.
    a = jax.random.uniform(k_graph, (graph_dim, graph_dim), jnp.float32)
    graph_prior = (a + a.T) * 0.5

    model = GraphRegularizedLinearModelPallas(graph_prior, input_dim, alpha=0.1, key=k_params)
    h = jax.random.normal(k_h, (batch, input_dim), jnp.float32)

    # Pallas forward + loss (small, single-tile path)
    out = jax.block_until_ready(model.forward(h))
    loss = jax.block_until_ready(model.regularized_loss())

    # Reference checks in plain JAX
    out_ref = h @ model.weight.T + model.bias
    params = model.weight[:, :graph_dim]
    loss_ref = 0.1 * (params @ model.laplacian @ params.T).squeeze()

    assert out.shape == (batch, 1)
    assert jnp.allclose(out, out_ref, atol=1e-5, rtol=1e-5)
    assert jnp.allclose(loss, loss_ref, atol=1e-5, rtol=1e-5)

    # Larger case: exercises the tiled/pipelined path (grid > 1, ragged last
    # batch tile without any wrapper-side copy of h, lane-dense output stores,
    # "parallel" batch axis).
    big_n, big_d = 1061, 256   # deliberately not a multiple of the tile
    h_big = jax.random.normal(k_h2, (big_n, big_d), jnp.float32)
    w_big = jax.random.normal(k_w2, (1, big_d), jnp.float32) * 0.05
    b_big = jnp.array([0.25], dtype=jnp.float32)

    out_big = jax.block_until_ready(linear_forward(h_big, w_big, b_big))
    ref_big = h_big @ w_big.T + b_big
    assert out_big.shape == (big_n, 1)
    assert jnp.allclose(out_big, ref_big, atol=1e-4, rtol=1e-4)

    print("KERNEL_OK")
</pallas_src>

<mosaic_0001>
module attributes {stable_mosaic.version = 11 : i64} {
  func.func @_linear_fwd_kernel(%arg0: i32, %arg1: memref<1x32xf32, #tpu.memory_space<vmem>>, %arg2: memref<1x1xf32, #tpu.memory_space<smem>>, %arg3: memref<8x32xf32, #tpu.memory_space<vmem>>, %arg4: memref<1x8xf32, #tpu.memory_space<vmem>>) attributes {dimension_semantics = [#tpu.dimension_semantics<parallel>], iteration_bounds = array<i64: 1>, scalar_prefetch = 0 : i64, scratch_operands = 0 : i64, tpu.core_type = #tpu.core_type<tc>, window_params = [{pipeline_mode = #tpu.pipeline_mode<synchronous>, transform_indices = @transform_0, window_bounds = array<i64: 1, 32>}, {transform_indices = @transform_1, window_bounds = array<i64: 1, 1>}, {transform_indices = @transform_2, window_bounds = array<i64: 8, 32>}, {transform_indices = @transform_3, window_bounds = array<i64: 1, 8>}]} {
    %c0 = arith.constant 0 : index
    %c0_0 = arith.constant 0 : index
    %0 = vector.load %arg3[%c0, %c0_0] : memref<8x32xf32, #tpu.memory_space<vmem>>, vector<8x32xf32>
    %c0_1 = arith.constant 0 : index
    %c0_2 = arith.constant 0 : index
    %1 = vector.load %arg1[%c0_1, %c0_2] : memref<1x32xf32, #tpu.memory_space<vmem>>, vector<1x32xf32>
    %cst = arith.constant dense<0.000000e+00> : vector<1x8xf32>
    %2 = tpu.matmul %1, %0, %cst {dimension_numbers = #tpu.dot_dimension_numbers<[1], [1], [0], [0], [0, 0, 1, 0], [], []>} : vector<1x32xf32>, vector<8x32xf32>, vector<1x8xf32> -> vector<1x8xf32>
    %c0_3 = arith.constant 0 : index
    %c0_4 = arith.constant 0 : index
    %3 = memref.load %arg2[%c0_3, %c0_4] : memref<1x1xf32, #tpu.memory_space<smem>>
    %4 = vector.broadcast %3 : f32 to vector<1x8xf32>
    %5 = arith.addf %2, %4 : vector<1x8xf32>
    %c0_5 = arith.constant 0 : index
    %c0_6 = arith.constant 0 : index
    %6 = vector.load %arg4[%c0_5, %c0_6] : memref<1x8xf32, #tpu.memory_space<vmem>>, vector<1x8xf32>
    tpu.vector_store %arg4[%c0_5, %c0_6], %5 {strides = array<i32>} : memref<1x8xf32, #tpu.memory_space<vmem>>, vector<1x8xf32>,
    return
  }
  func.func @transform_0(%arg0: i32) -> (i32, i32) {
    %c0_i32 = arith.constant 0 : i32
    %c0_i32_0 = arith.constant 0 : i32
    %c0_i32_1 = arith.constant 0 : i32
    return %c0_i32, %c0_i32_0 : i32, i32
  }
  func.func @transform_1(%arg0: i32) -> (i32, i32) {
    %c0_i32 = arith.constant 0 : i32
    %c0_i32_0 = arith.constant 0 : i32
    %c0_i32_1 = arith.constant 0 : i32
    return %c0_i32, %c0_i32_0 : i32, i32
  }
  func.func @transform_2(%arg0: i32) -> (i32, i32) {
    %c0_i32 = arith.constant 0 : i32
    %c0_i32_0 = arith.constant 0 : i32
    return %arg0, %c0_i32 : i32, i32
  }
  func.func @transform_3(%arg0: i32) -> (i32, i32) {
    %c0_i32 = arith.constant 0 : i32
    %c0_i32_0 = arith.constant 0 : i32
    return %c0_i32, %arg0 : i32, i32
  }
}

</mosaic_0001>

<llo_original>
// kernel: tpu_custom_call.1
$region0: #{tpu_custom_call.1}
  #allocation0 [shape = 'u32[]', space=smem, size = 0x4, offset = 0x4, fixed_abs, tag = 'smem constant byte address 0x4 - core index']
  #allocation1 [shape = 'u32[144,128]{1,0:T(1,128)}', space=vmem, size = 0x12000, scoped, tag = 'internal scratch']
  #allocation2 [shape = 'f32[1,1]{1,0:T(1,128)S(6)}', space=smem, size = 0x200, scoped, tag = 'scoped memory for tpu_custom_call.1']
  %s0 = inlined_call_operand.vmem [shape: f32[1,32], index: 0, kind: input, shape index: {}]
  %s1 = inlined_call_operand.<no memory space> [shape: f32[1,1], index: 1, kind: input, shape index: {}]
  %s2 = inlined_call_operand.hbm [shape: f32[8,32], index: 2, kind: input, shape index: {}]
  %s3 = inlined_call_operand.hbm [shape: f32[1,8], index: 3, kind: output, shape index: {}]
  %s4 = sld [smem:[#allocation0]]
  $region26: #{tpu_custom_call.1} parent=0
    _
  %s6 = ssub.s32 1, %s4
  %s7 = scalar_select 0, %s6, %s4
  %8 = sst [smem:[#allocation2]] %s1
  $region1: #{tpu_custom_call.1} parent=0
    #allocation3 [shape = 'u8[4096]{0}', space=vmem, size = 0x1000, scoped, tag = 'input window, operand 2, single buffered']
    #allocation4 [shape = 's32[1]{0}', space=sflag, size = 0x4, scoped, tag = 'scoped memory for tpu_custom_call.1']
    #allocation5 [shape = 's32[1]{0}', space=sflag, size = 0x4, scoped, tag = 'scoped memory for tpu_custom_call.1']
    #allocation6 [shape = 'u8[512]{0}', space=vmem, size = 0x400, scoped, tag = 'output window, operand 0, single buffered']
    %9 = vsyncpa [#allocation4], 0
    %10 = vsyncpa [#allocation5], 0
    // Predicated region
    $region2: #{tpu_custom_call.1} parent=1 // pred_check
      _
    $region3: #{tpu_custom_call.1} parent=1 // pred_check_branch
      %12 = sbr.rel (0) target = $region5
    $region4: #{tpu_custom_call.1} parent=1 // pred_region
      _
    $region5: #{tpu_custom_call.1} parent=1 // pred_fallthru
      _
    // Predicated region
    $region6: #{tpu_custom_call.1} parent=1 // pred_check
      _
    $region7: #{tpu_custom_call.1} parent=1 // pred_check_branch
      %14 = sbr.rel (0) target = $region9
    $region8: #{tpu_custom_call.1} parent=1 // pred_region
      _
    $region9: #{tpu_custom_call.1} parent=1 // pred_fallthru
      _
    // Predicated region
    $region10: #{tpu_custom_call.1} parent=1 // pred_check
      _
    $region11: #{tpu_custom_call.1} parent=1 // pred_check_branch
      %16 = sbr.rel (0) target = $region13
    $region12: #{tpu_custom_call.1} parent=1 // pred_region
      %s18 = ssub.s32 128, 128
      %19 = vsyncadd [#allocation4], %s18
      %s21 = sshll.u32 [#allocation3], 4
      %s22 = int_to_ptr.vmem [resolvable:$true] %s21
      %24 = dma.hbm_to_vmem [thread:$0]  %s2, 128, %s22, [#allocation4]
    $region13: #{tpu_custom_call.1} parent=1 // pred_fallthru
      _
    // Predicated region
    $region14: #{tpu_custom_call.1} parent=1 // pred_check
      _
    $region15: #{tpu_custom_call.1} parent=1 // pred_check_branch
      %26 = sbr.rel (0) target = $region17
    $region16: #{tpu_custom_call.1} parent=1 // pred_region
      %27 = dma.done [#allocation4], 128
    $region17: #{tpu_custom_call.1} parent=1 // pred_fallthru
      _
    %v28 = vld [vmem:[#allocation3] sm:$0xff]
    %v29 = vld [vmem:[%s0] sm:$0x1]
    %s30 = sld [smem:[#allocation2]]
    %v31 = vstv %s30
    %vm32 = vcmask 261120
    %v34 = vsel %vm32, %v29, 0
    %v37 = vsel %vm32, %v28, 0
    %39 = vmatprep.subr.mxu0 0.0
    %40 = vmatpush1.xpose.msra.mxu0 %v37
    %41 = vmatprep.subr.mxu0 0.0
    %42 = vmatpush1.xpose.msra.mxu0 0.0
    %43 = vmatprep.subr.mxu0 0.0
    %44 = vmatpush1.xpose.msra.mxu0 0.0
    %45 = vmatprep.subr.mxu0 0.0
    %46 = vmatpush1.xpose.msra.mxu0 0.0
    %47 = vmatprep.subr.mxu0 0.0
    %48 = vmatpush1.xpose.msra.mxu0 0.0
    %49 = vmatprep.subr.mxu0 0.0
    %50 = vmatpush1.xpose.msra.mxu0 0.0
    %51 = vmatprep.subr.mxu0 0.0
    %52 = vmatpush1.xpose.msra.mxu0 0.0
    %53 = vmatprep.subr.mxu0 0.0
    %54 = vmatpush1.xpose.msra.mxu0 0.0
    %55 = vmatprep.subr.mxu0 0.0
    %56 = vmatpush1.xpose.msra.mxu0 0.0
    %57 = vmatprep.subr.mxu0 0.0
    %58 = vmatpush1.xpose.msra.mxu0 0.0
    %59 = vmatprep.subr.mxu0 0.0
    %60 = vmatpush1.xpose.msra.mxu0 0.0
    %61 = vmatprep.subr.mxu0 0.0
    %62 = vmatpush1.xpose.msra.mxu0 0.0
    %63 = vmatprep.subr.mxu0 0.0
    %64 = vmatpush1.xpose.msra.mxu0 0.0
    %65 = vmatprep.subr.mxu0 0.0
    %66 = vmatpush1.xpose.msra.mxu0 0.0
    %67 = vmatprep.subr.mxu0 0.0
    %68 = vmatpush1.xpose.msra.mxu0 0.0
    %69 = vmatprep.subr.mxu0 0.0
    %70 = vmatpush1.xpose.msra.mxu0 0.0
    %71 = vmatprep.subr.mxu0 0.0
    %72 = vmatpush1.xpose.msra.mxu0 0.0
    %73 = vmatprep.subr.mxu0 0.0
    %74 = vmatpush1.xpose.msra.mxu0 0.0
    %75 = vmatprep.subr.mxu0 0.0
    %76 = vmatpush1.xpose.msra.mxu0 0.0
    %77 = vmatprep.subr.mxu0 0.0
    %78 = vmatpush1.xpose.msra.mxu0 0.0
    %79 = vmatprep.subr.mxu0 0.0
    %80 = vmatpush1.xpose.msra.mxu0 0.0
    %81 = vmatprep.subr.mxu0 0.0
    %82 = vmatpush1.xpose.msra.mxu0 0.0
    %83 = vmatprep.subr.mxu0 0.0
    %84 = vmatpush1.xpose.msra.mxu0 0.0
    %85 = vmatprep.subr.mxu0 0.0
    %86 = vmatpush1.xpose.msra.mxu0 0.0
    %87 = vmatprep.subr.mxu0 0.0
    %88 = vmatpush1.xpose.msra.mxu0 0.0
    %89 = vmatprep.subr.mxu0 0.0
    %90 = vmatpush1.xpose.msra.mxu0 0.0
    %91 = vmatprep.subr.mxu0 0.0
    %92 = vmatpush1.xpose.msra.mxu0 0.0
    %93 = vmatprep.subr.mxu0 0.0
    %94 = vmatpush1.xpose.msra.mxu0 0.0
    %95 = vmatprep.subr.mxu0 0.0
    %96 = vmatpush1.xpose.msra.mxu0 0.0
    %97 = vmatprep.subr.mxu0 0.0
    %98 = vmatpush1.xpose.msra.mxu0 0.0
    %99 = vmatprep.subr.mxu0 0.0
    %100 = vmatpush1.xpose.msra.mxu0 0.0
    %101 = vmatprep.subr.mxu0 0.0
    %102 = vmatpush1.xpose.msra.mxu0 0.0
    %103 = vmatprep.mubr.f32.mxu0 0.0
    %104 = vmatmul.mubr.f32.gmra.mrb[0].mxu0 %v34
    %v105 = vpop.f32.mrb[0].mxu0
    %v106 = vadd.f32 %v31, %v105
    %v107 = vpop.f32.mrb[0].mxu0
    %108 = vdwg.mxu0
    %vm109 = vcmask 57344
    %110 = vst.msk [vmem:[#allocation6] sm:$0x1] %vm109, %v106
    // Predicated region
    $region18: #{tpu_custom_call.1} parent=1 // pred_check
      _
    $region19: #{tpu_custom_call.1} parent=1 // pred_check_branch
      %112 = sbr.rel (0) target = $region21
    $region20: #{tpu_custom_call.1} parent=1 // pred_region
      %s114 = ssub.s32 16, 16
      %115 = vsyncadd [#allocation5], %s114
      %s117 = sshll.u32 [#allocation6], 4
      %s118 = int_to_ptr.vmem [resolvable:$true] %s117
      %120 = dma.vmem_to_hbm [thread:$0]  %s118, 16, %s3, [#allocation5]
    $region21: #{tpu_custom_call.1} parent=1 // pred_fallthru
      _
    // Predicated region
    $region22: #{tpu_custom_call.1} parent=1 // pred_check
      _
    $region23: #{tpu_custom_call.1} parent=1 // pred_check_branch
      %122 = sbr.rel (0) target = $region25
    $region24: #{tpu_custom_call.1} parent=1 // pred_region
      %123 = dma.done [#allocation5], 16
    $region25: #{tpu_custom_call.1} parent=1 // pred_fallthru
      _
    %124 = vsyncpa [#allocation4], 1
    %125 = vsyncpa [#allocation5], 1

</llo_original>
